<compile_context>
chip_gen: v7x
topology: tpu7x:2x2x1
jax: 0.10.0
libtpu: 0.0.40
codegen_flags: <defaults>
</compile_context>

<pallas_src>
import jax
import jax.numpy as jnp
from jax.experimental import pallas as pl
from jax.experimental.pallas import tpu as pltpu


def _nn_kernel(x_ref, w_ref, b_ref, o_ref):
    x = x_ref[...]                       # (TB, D)  f32, streamed tile of x
    w = w_ref[...]                       # (1, D)   f32, lane-dense weight row
    b = b_ref[0]                         # scalar bias from SMEM

    # (1, D) . (TB, D)^T -> (1, TB): lane-dense output row (MXU, idle anyway
    # since the kernel is HBM-bound; weight and output both stay lane-dense).
    y = jax.lax.dot_general(
        w, x,
        dimension_numbers=(((1,), (1,)), ((), ())),
        preferred_element_type=jnp.float32,
    )
    o_ref[...] = jnp.tanh(y + b).astype(o_ref.dtype)


def nn_forward(x, weight, bias, *, max_block_rows=1024,
               vmem_budget_bytes=8 * 1024 * 1024):
    """x: (B, D) f32; weight: (1, D) f32 (torch layout); bias: (1,) f32.

    Returns tanh(x @ weight.T + bias) with shape (B, 1).
    """
    B, D = x.shape
    w = weight.reshape(1, D)
    b = bias.reshape(1)
    itemsize = jnp.dtype(x.dtype).itemsize

    # Batch tile: lane-aligned (multiple of 128) and small enough that the
    # double-buffered x tile stays within the per-buffer VMEM budget.
    # TODO(synk): for very large D, add a K-reduction grid axis with an f32
    # accumulator (pl.when init/finalize) instead of one full-D block.
    rows_fit = max(128, (vmem_budget_bytes // (2 * D * itemsize)) // 128 * 128)
    tb = min(max_block_rows, rows_fit)

    if B <= tb:
        tb = B                       # single tile: block == full array dims
        bp = B
        x_p = x
    else:
        bp = -(-B // tb) * tb        # pad ragged batch up to a tile multiple
        x_p = jnp.pad(x, ((0, bp - B), (0, 0))) if bp != B else x

    grid = (bp // tb,)

    out = pl.pallas_call(
        _nn_kernel,
        out_shape=jax.ShapeDtypeStruct((1, bp), x.dtype),
        grid_spec=pltpu.PrefetchScalarGridSpec(
            num_scalar_prefetch=0,
            grid=grid,
            in_specs=[
                pl.BlockSpec((tb, D), lambda i: (i, 0)),             # x tiles
                pl.BlockSpec((1, D), lambda i: (0, 0)),              # weight
                pl.BlockSpec(memory_space=pltpu.MemorySpace.SMEM),   # bias
            ],
            out_specs=pl.BlockSpec((1, tb), lambda i: (0, i)),
        ),
        compiler_params=pltpu.CompilerParams(
            dimension_semantics=("parallel",),
            vmem_limit_bytes=32 * 1024 * 1024,
        ),
        cost_estimate=pl.CostEstimate(
            flops=2 * B * D,
            transcendentals=B,
            bytes_accessed=itemsize * (B * D + D + 1 + B),
        ),
    )(x_p, w, b)

    return out[0, :B].reshape(B, 1)


def _reference(x, weight, bias):
    return jnp.tanh(x @ weight.T + bias)


if __name__ == "__main__":
    key = jax.random.PRNGKey(0)
    k_x, k_w, k_b, k_x2 = jax.random.split(key, 4)

    input_size = 32
    bound = 1.0 / (input_size ** 0.5)
    weight = jax.random.uniform(
        k_w, (1, input_size), dtype=jnp.float32, minval=-bound, maxval=bound
    )
    bias = jax.random.uniform(
        k_b, (1,), dtype=jnp.float32, minval=-bound, maxval=bound
    )

    # --- small single-tile case (block == full array) ---
    batch = 8
    x = jax.random.normal(k_x, (batch, input_size), dtype=jnp.float32)
    out = jax.block_until_ready(nn_forward(x, weight, bias))
    ref = _reference(x, weight, bias)
    assert out.shape == (batch, 1)
    assert jnp.allclose(out, ref, atol=1e-5, rtol=1e-5)

    # --- multi-tile pipelined case (exercises tiling + ragged-batch padding) ---
    batch2 = 300
    x2 = jax.random.normal(k_x2, (batch2, input_size), dtype=jnp.float32)
    out2 = jax.block_until_ready(
        nn_forward(x2, weight, bias, max_block_rows=128)
    )
    ref2 = _reference(x2, weight, bias)
    assert out2.shape == (batch2, 1)
    assert jnp.allclose(out2, ref2, atol=1e-5, rtol=1e-5)

    print("KERNEL_OK")
</pallas_src>

<mosaic_0001>
module attributes {stable_mosaic.version = 11 : i64} {
  func.func @_nn_kernel(%arg0: i32, %arg1: memref<8x32xf32, #tpu.memory_space<vmem>>, %arg2: memref<1x32xf32, #tpu.memory_space<vmem>>, %arg3: memref<1xf32, #tpu.memory_space<smem>>, %arg4: memref<1x8xf32, #tpu.memory_space<vmem>>) attributes {dimension_semantics = [#tpu.dimension_semantics<parallel>], iteration_bounds = array<i64: 1>, scalar_prefetch = 0 : i64, scratch_operands = 0 : i64, tpu.core_type = #tpu.core_type<tc>, window_params = [{transform_indices = @transform_0, window_bounds = array<i64: 8, 32>}, {pipeline_mode = #tpu.pipeline_mode<synchronous>, transform_indices = @transform_1, window_bounds = array<i64: 1, 32>}, {transform_indices = @transform_2, window_bounds = array<i64: 1>}, {transform_indices = @transform_3, window_bounds = array<i64: 1, 8>}]} {
    %c0 = arith.constant 0 : index
    %c0_0 = arith.constant 0 : index
    %0 = vector.load %arg1[%c0, %c0_0] : memref<8x32xf32, #tpu.memory_space<vmem>>, vector<8x32xf32>
    %c0_1 = arith.constant 0 : index
    %c0_2 = arith.constant 0 : index
    %1 = vector.load %arg2[%c0_1, %c0_2] : memref<1x32xf32, #tpu.memory_space<vmem>>, vector<1x32xf32>
    %c0_3 = arith.constant 0 : index
    %2 = memref.load %arg3[%c0_3] : memref<1xf32, #tpu.memory_space<smem>>
    %cst = arith.constant dense<0.000000e+00> : vector<1x8xf32>
    %3 = tpu.matmul %1, %0, %cst {dimension_numbers = #tpu.dot_dimension_numbers<[1], [1], [0], [0], [0, 0, 1, 0], [], []>} : vector<1x32xf32>, vector<8x32xf32>, vector<1x8xf32> -> vector<1x8xf32>
    %4 = vector.broadcast %2 : f32 to vector<1x8xf32>
    %5 = arith.addf %3, %4 : vector<1x8xf32>
    %6 = math.tanh %5 : vector<1x8xf32>
    %c0_4 = arith.constant 0 : index
    %c0_5 = arith.constant 0 : index
    %7 = vector.load %arg4[%c0_4, %c0_5] : memref<1x8xf32, #tpu.memory_space<vmem>>, vector<1x8xf32>
    tpu.vector_store %arg4[%c0_4, %c0_5], %6 {strides = array<i32>} : memref<1x8xf32, #tpu.memory_space<vmem>>, vector<1x8xf32>,
    return
  }
  func.func @transform_0(%arg0: i32) -> (i32, i32) {
    %c0_i32 = arith.constant 0 : i32
    %c0_i32_0 = arith.constant 0 : i32
    return %arg0, %c0_i32 : i32, i32
  }
  func.func @transform_1(%arg0: i32) -> (i32, i32) {
    %c0_i32 = arith.constant 0 : i32
    %c0_i32_0 = arith.constant 0 : i32
    %c0_i32_1 = arith.constant 0 : i32
    return %c0_i32, %c0_i32_0 : i32, i32
  }
  func.func @transform_2(%arg0: i32) -> i32 {
    %c0_i32 = arith.constant 0 : i32
    %c0_i32_0 = arith.constant 0 : i32
    return %c0_i32 : i32
  }
  func.func @transform_3(%arg0: i32) -> (i32, i32) {
    %c0_i32 = arith.constant 0 : i32
    %c0_i32_0 = arith.constant 0 : i32
    return %c0_i32, %arg0 : i32, i32
  }
}

</mosaic_0001>

<llo_original>
// kernel: tpu_custom_call.1
$region0: #{tpu_custom_call.1}
  #allocation0 [shape = 'u32[]', space=smem, size = 0x4, offset = 0x4, fixed_abs, tag = 'smem constant byte address 0x4 - core index']
  #allocation1 [shape = 'u32[144,128]{1,0:T(1,128)}', space=vmem, size = 0x12000, scoped, tag = 'internal scratch']
  #allocation2 [shape = 'f32[1]{0:T(128)S(6)}', space=smem, size = 0x200, scoped, tag = 'scoped memory for tpu_custom_call.1']
  %s0 = inlined_call_operand.hbm [shape: f32[8,32], index: 0, kind: input, shape index: {}]
  %s1 = inlined_call_operand.vmem [shape: f32[1,32], index: 1, kind: input, shape index: {}]
  %s2 = inlined_call_operand.<no memory space> [shape: f32[1], index: 2, kind: input, shape index: {}]
  %s3 = inlined_call_operand.hbm [shape: f32[1,8], index: 3, kind: output, shape index: {}]
  %s4 = sld [smem:[#allocation0]]
  $region26: #{tpu_custom_call.1} parent=0
    _
  %s6 = ssub.s32 1, %s4
  %s7 = scalar_select 0, %s6, %s4
  %8 = sst [smem:[#allocation2]] %s2
  $region1: #{tpu_custom_call.1} parent=0
    #allocation3 [shape = 'u8[4096]{0}', space=vmem, size = 0x1000, scoped, tag = 'input window, operand 0, single buffered']
    #allocation4 [shape = 's32[1]{0}', space=sflag, size = 0x4, scoped, tag = 'scoped memory for tpu_custom_call.1']
    #allocation5 [shape = 's32[1]{0}', space=sflag, size = 0x4, scoped, tag = 'scoped memory for tpu_custom_call.1']
    #allocation6 [shape = 'u8[512]{0}', space=vmem, size = 0x400, scoped, tag = 'output window, operand 0, single buffered']
    %9 = vsyncpa [#allocation4], 0
    %10 = vsyncpa [#allocation5], 0
    // Predicated region
    $region2: #{tpu_custom_call.1} parent=1 // pred_check
      _
    $region3: #{tpu_custom_call.1} parent=1 // pred_check_branch
      %12 = sbr.rel (0) target = $region5
    $region4: #{tpu_custom_call.1} parent=1 // pred_region
      %s14 = ssub.s32 128, 128
      %15 = vsyncadd [#allocation4], %s14
      %s17 = sshll.u32 [#allocation3], 4
      %s18 = int_to_ptr.vmem [resolvable:$true] %s17
      %20 = dma.hbm_to_vmem [thread:$0]  %s0, 128, %s18, [#allocation4]
    $region5: #{tpu_custom_call.1} parent=1 // pred_fallthru
      _
    // Predicated region
    $region6: #{tpu_custom_call.1} parent=1 // pred_check
      _
    $region7: #{tpu_custom_call.1} parent=1 // pred_check_branch
      %22 = sbr.rel (0) target = $region9
    $region8: #{tpu_custom_call.1} parent=1 // pred_region
      _
    $region9: #{tpu_custom_call.1} parent=1 // pred_fallthru
      _
    // Predicated region
    $region10: #{tpu_custom_call.1} parent=1 // pred_check
      _
    $region11: #{tpu_custom_call.1} parent=1 // pred_check_branch
      %24 = sbr.rel (0) target = $region13
    $region12: #{tpu_custom_call.1} parent=1 // pred_region
      _
    $region13: #{tpu_custom_call.1} parent=1 // pred_fallthru
      _
    // Predicated region
    $region14: #{tpu_custom_call.1} parent=1 // pred_check
      _
    $region15: #{tpu_custom_call.1} parent=1 // pred_check_branch
      %26 = sbr.rel (0) target = $region17
    $region16: #{tpu_custom_call.1} parent=1 // pred_region
      %27 = dma.done [#allocation4], 128
    $region17: #{tpu_custom_call.1} parent=1 // pred_fallthru
      _
    %v28 = vld [vmem:[#allocation3] sm:$0xff]
    %v29 = vld [vmem:[%s1] sm:$0x1]
    %s30 = sld [smem:[#allocation2]]
    %v31 = vstv %s30
    %vm32 = vcmask 261120
    %v34 = vsel %vm32, %v29, 0
    %v37 = vsel %vm32, %v28, 0
    %39 = vmatprep.subr.mxu0 0.0
    %40 = vmatpush1.xpose.msra.mxu0 %v37
    %41 = vmatprep.subr.mxu0 0.0
    %42 = vmatpush1.xpose.msra.mxu0 0.0
    %43 = vmatprep.subr.mxu0 0.0
    %44 = vmatpush1.xpose.msra.mxu0 0.0
    %45 = vmatprep.subr.mxu0 0.0
    %46 = vmatpush1.xpose.msra.mxu0 0.0
    %47 = vmatprep.subr.mxu0 0.0
    %48 = vmatpush1.xpose.msra.mxu0 0.0
    %49 = vmatprep.subr.mxu0 0.0
    %50 = vmatpush1.xpose.msra.mxu0 0.0
    %51 = vmatprep.subr.mxu0 0.0
    %52 = vmatpush1.xpose.msra.mxu0 0.0
    %53 = vmatprep.subr.mxu0 0.0
    %54 = vmatpush1.xpose.msra.mxu0 0.0
    %55 = vmatprep.subr.mxu0 0.0
    %56 = vmatpush1.xpose.msra.mxu0 0.0
    %57 = vmatprep.subr.mxu0 0.0
    %58 = vmatpush1.xpose.msra.mxu0 0.0
    %59 = vmatprep.subr.mxu0 0.0
    %60 = vmatpush1.xpose.msra.mxu0 0.0
    %61 = vmatprep.subr.mxu0 0.0
    %62 = vmatpush1.xpose.msra.mxu0 0.0
    %63 = vmatprep.subr.mxu0 0.0
    %64 = vmatpush1.xpose.msra.mxu0 0.0
    %65 = vmatprep.subr.mxu0 0.0
    %66 = vmatpush1.xpose.msra.mxu0 0.0
    %67 = vmatprep.subr.mxu0 0.0
    %68 = vmatpush1.xpose.msra.mxu0 0.0
    %69 = vmatprep.subr.mxu0 0.0
    %70 = vmatpush1.xpose.msra.mxu0 0.0
    %71 = vmatprep.subr.mxu0 0.0
    %72 = vmatpush1.xpose.msra.mxu0 0.0
    %73 = vmatprep.subr.mxu0 0.0
    %74 = vmatpush1.xpose.msra.mxu0 0.0
    %75 = vmatprep.subr.mxu0 0.0
    %76 = vmatpush1.xpose.msra.mxu0 0.0
    %77 = vmatprep.subr.mxu0 0.0
    %78 = vmatpush1.xpose.msra.mxu0 0.0
    %79 = vmatprep.subr.mxu0 0.0
    %80 = vmatpush1.xpose.msra.mxu0 0.0
    %81 = vmatprep.subr.mxu0 0.0
    %82 = vmatpush1.xpose.msra.mxu0 0.0
    %83 = vmatprep.subr.mxu0 0.0
    %84 = vmatpush1.xpose.msra.mxu0 0.0
    %85 = vmatprep.subr.mxu0 0.0
    %86 = vmatpush1.xpose.msra.mxu0 0.0
    %87 = vmatprep.subr.mxu0 0.0
    %88 = vmatpush1.xpose.msra.mxu0 0.0
    %89 = vmatprep.subr.mxu0 0.0
    %90 = vmatpush1.xpose.msra.mxu0 0.0
    %91 = vmatprep.subr.mxu0 0.0
    %92 = vmatpush1.xpose.msra.mxu0 0.0
    %93 = vmatprep.subr.mxu0 0.0
    %94 = vmatpush1.xpose.msra.mxu0 0.0
    %95 = vmatprep.subr.mxu0 0.0
    %96 = vmatpush1.xpose.msra.mxu0 0.0
    %97 = vmatprep.subr.mxu0 0.0
    %98 = vmatpush1.xpose.msra.mxu0 0.0
    %99 = vmatprep.subr.mxu0 0.0
    %100 = vmatpush1.xpose.msra.mxu0 0.0
    %101 = vmatprep.subr.mxu0 0.0
    %102 = vmatpush1.xpose.msra.mxu0 0.0
    %103 = vmatprep.mubr.f32.mxu0 0.0
    %104 = vmatmul.mubr.f32.gmra.mrb[0].mxu0 %v34
    %v105 = vpop.f32.mrb[0].mxu0
    %v106 = vadd.f32 %v31, %v105
    %v107 = vpop.f32.mrb[0].mxu0
    %108 = vdwg.mxu0
    %v109 = vtanh.pop %v106
    %vm110 = vcmask 57344
    %111 = vst.msk [vmem:[#allocation6] sm:$0x1] %vm110, %v109
    // Predicated region
    $region18: #{tpu_custom_call.1} parent=1 // pred_check
      _
    $region19: #{tpu_custom_call.1} parent=1 // pred_check_branch
      %113 = sbr.rel (0) target = $region21
    $region20: #{tpu_custom_call.1} parent=1 // pred_region
      %s115 = ssub.s32 16, 16
      %116 = vsyncadd [#allocation5], %s115
      %s118 = sshll.u32 [#allocation6], 4
      %s119 = int_to_ptr.vmem [resolvable:$true] %s118
      %121 = dma.vmem_to_hbm [thread:$0]  %s119, 16, %s3, [#allocation5]
    $region21: #{tpu_custom_call.1} parent=1 // pred_fallthru
      _
    // Predicated region
    $region22: #{tpu_custom_call.1} parent=1 // pred_check
      _
    $region23: #{tpu_custom_call.1} parent=1 // pred_check_branch
      %123 = sbr.rel (0) target = $region25
    $region24: #{tpu_custom_call.1} parent=1 // pred_region
      %124 = dma.done [#allocation5], 16
    $region25: #{tpu_custom_call.1} parent=1 // pred_fallthru
      _
    %125 = vsyncpa [#allocation4], 1
    %126 = vsyncpa [#allocation5], 1

</llo_original>
